<compile_context>
chip_gen: v6e
topology: v6e:2x2x1
jax: 0.10.0
libtpu: 0.0.40
codegen_flags: <defaults>
</compile_context>

<pallas_src>
import jax
import jax.numpy as jnp
import numpy as np
from jax import lax
from jax.experimental import pallas as pl
from jax.experimental.pallas import tpu as pltpu


def lstm_kernel(x_ref, w_ih_ref, w_hh_ref, b_ref, w_lin_ref, b_lin_ref,
                out_ref, xp_ref):
    # x_ref:     (L, I)
    # w_ih_ref:  (I, 4H)   gate-stacked input->hidden weights (transposed)
    # w_hh_ref:  (H, 4H)   gate-stacked hidden->hidden weights (transposed)
    # b_ref:     (1, 4H)   gate-stacked bias (b_ih + b_hh)
    # w_lin_ref: (H, O)    linear head weight (transposed)
    # b_lin_ref: (1, O)
    # out_ref:   (1, O)    prediction for the LAST timestep
    # xp_ref:    (L, 4H)   scratch: precomputed input projections (lane-dense)
    L = x_ref.shape[0]
    H = w_hh_ref.shape[0]
    G = 4 * H

    # Input projection for all timesteps: one lane-dense MXU matmul.
    xp_ref[...] = (jnp.dot(x_ref[...], w_ih_ref[...],
                           preferred_element_type=jnp.float32)
                   + b_ref[...])

    # Hoisted recurrent weight and lane masks (computed once, reused by every
    # unrolled iteration).  alpha/beta implement, per lane:
    #   i/f/o lanes: sigmoid(x) = 0.5 * tanh(0.5 * x) + 0.5
    #   g lane     : tanh(x)
    w_hh = w_hh_ref[...]
    lane = lax.broadcasted_iota(jnp.int32, (1, G), 1)
    is_g = (lane >= 2 * H) & (lane < 3 * H)
    alpha = jnp.where(is_g, 1.0, 0.5).astype(jnp.float32)
    beta = jnp.where(is_g, 0.0, 0.5).astype(jnp.float32)

    def step(t, carry):
        h, c = carry
        # Single (1,H)@(H,4H) matmul per step + one unmasked (1,4H) xp load.
        pre = xp_ref[pl.ds(t, 1), :] + jnp.dot(
            h, w_hh, preferred_element_type=jnp.float32)
        # One full-width transcendental pass for all four gates.
        tl = jnp.tanh(pre * alpha)
        gates = tl * alpha + beta
        i_g = gates[:, 0:H]
        f_g = gates[:, H:2 * H]
        g_g = gates[:, 2 * H:3 * H]
        o_g = gates[:, 3 * H:4 * H]
        c_new = f_g * c + i_g * g_g
        h_new = o_g * jnp.tanh(c_new)
        return h_new, c_new

    h0 = jnp.zeros((1, H), jnp.float32)
    c0 = jnp.zeros((1, H), jnp.float32)
    # Short static trip count -> fully unroll so the scheduler sees across
    # iterations (h/c stay in vregs the whole time).
    h_fin, _ = lax.fori_loop(0, L, step, (h0, c0), unroll=True)

    # Linear head on the final hidden state (== predictions[-1]).
    out_ref[...] = (jnp.dot(h_fin, w_lin_ref[...],
                            preferred_element_type=jnp.float32)
                    + b_lin_ref[...])


def lstm_forward(x, w_ih, w_hh, b, w_lin_t, b_lin):
    """x: (L, input_size) float32 -> (output_size,) float32."""
    L, I = x.shape
    H = w_hh.shape[0]
    G = 4 * H
    O = w_lin_t.shape[1]
    vmem = pl.BlockSpec(memory_space=pltpu.MemorySpace.VMEM)

    flops = 2 * L * I * G + 2 * L * H * G + 2 * H * O
    transcendentals = L * (G + H)
    bytes_accessed = 4 * (x.size + w_ih.size + w_hh.size + b.size
                          + w_lin_t.size + b_lin.size + O)

    out = pl.pallas_call(
        lstm_kernel,
        out_shape=jax.ShapeDtypeStruct((1, O), jnp.float32),
        in_specs=[vmem] * 6,
        out_specs=vmem,
        scratch_shapes=[
            pltpu.VMEM((L, G), jnp.float32),  # lane-dense xp scratch
        ],
        compiler_params=pltpu.CompilerParams(
            vmem_limit_bytes=4 * 1024 * 1024),
        cost_estimate=pl.CostEstimate(
            flops=flops,
            transcendentals=transcendentals,
            bytes_accessed=bytes_accessed),
    )(x, w_ih, w_hh, b, w_lin_t, b_lin)
    return out.reshape(O)
    # TODO(synk): for v7x throughput with many independent sequences, add a
    # "parallel" leading grid axis so both TensorCores are used; a single
    # batch=1 recurrence is inherently serial.


def lstm_ref(x, w_ih, w_hh, b, w_lin_t, b_lin):
    """Pure-JAX reference with PyTorch LSTM equations (gate order i,f,g,o)."""
    L = x.shape[0]
    H = w_hh.shape[0]
    h = jnp.zeros((1, H), jnp.float32)
    c = jnp.zeros((1, H), jnp.float32)
    for t in range(L):
        pre = x[t:t + 1] @ w_ih + b + h @ w_hh  # (1, 4H)
        i = jax.nn.sigmoid(pre[:, 0:H])
        f = jax.nn.sigmoid(pre[:, H:2 * H])
        g = jnp.tanh(pre[:, 2 * H:3 * H])
        o = jax.nn.sigmoid(pre[:, 3 * H:4 * H])
        c = f * c + i * g
        h = o * jnp.tanh(c)
    return (h @ w_lin_t + b_lin).reshape(-1)


if __name__ == "__main__":
    # Small shapes consistent with the module: seq=8, input_size=4,
    # hidden_layer_size=32 (so 4H = 128 lanes), output_size=1, batch=1
    # (hardcoded by forward's .view(len, 1, -1)).
    L, I, H, O = 8, 4, 32, 1
    G = 4 * H

    key = jax.random.PRNGKey(0)
    ks = jax.random.split(key, 7)
    scale = 1.0 / np.sqrt(H)  # PyTorch-style uniform(-1/sqrt(H), 1/sqrt(H))

    x = jax.random.normal(ks[0], (L, I), jnp.float32)

    # Gate-stacked (i, f, g, o) weights, stored transposed for x @ W.
    w_ih = jax.random.uniform(ks[1], (I, G), jnp.float32, -scale, scale)
    w_hh = jax.random.uniform(ks[2], (H, G), jnp.float32, -scale, scale)
    b_ih = jax.random.uniform(ks[3], (1, G), jnp.float32, -scale, scale)
    b_hh = jax.random.uniform(ks[4], (1, G), jnp.float32, -scale, scale)
    b = b_ih + b_hh  # biases only ever appear summed
    w_lin_t = jax.random.uniform(ks[5], (H, O), jnp.float32, -scale, scale)
    b_lin = jax.random.uniform(ks[6], (1, O), jnp.float32, -scale, scale)

    pred = jax.block_until_ready(
        lstm_forward(x, w_ih, w_hh, b, w_lin_t, b_lin))
    ref = lstm_ref(x, w_ih, w_hh, b, w_lin_t, b_lin)

    np.testing.assert_allclose(np.asarray(pred), np.asarray(ref),
                               rtol=1e-4, atol=1e-5)
    print("KERNEL_OK")
</pallas_src>

<mosaic_0001>
module attributes {stable_mosaic.version = 11 : i64} {
  func.func @lstm_kernel(%arg0: memref<8x4xf32, #tpu.memory_space<vmem>>, %arg1: memref<4x128xf32, #tpu.memory_space<vmem>>, %arg2: memref<32x128xf32, #tpu.memory_space<vmem>>, %arg3: memref<1x128xf32, #tpu.memory_space<vmem>>, %arg4: memref<32x1xf32, #tpu.memory_space<vmem>>, %arg5: memref<1x1xf32, #tpu.memory_space<vmem>>, %arg6: memref<1x1xf32, #tpu.memory_space<vmem>>, %arg7: memref<8x128xf32, #tpu.memory_space<vmem>>) attributes {dimension_semantics = [], scalar_prefetch = 0 : i64, scratch_operands = 1 : i64, tpu.core_type = #tpu.core_type<tc>} {
    %c0 = arith.constant 0 : index
    %c0_0 = arith.constant 0 : index
    %0 = vector.load %arg0[%c0, %c0_0] : memref<8x4xf32, #tpu.memory_space<vmem>>, vector<8x4xf32>
    %c0_1 = arith.constant 0 : index
    %c0_2 = arith.constant 0 : index
    %1 = vector.load %arg1[%c0_1, %c0_2] : memref<4x128xf32, #tpu.memory_space<vmem>>, vector<4x128xf32>
    %cst = arith.constant dense<0.000000e+00> : vector<8x128xf32>
    %2 = tpu.matmul %0, %1, %cst {dimension_numbers = #tpu.dot_dimension_numbers<[1], [0], [0], [1], [0, 0, 1, 1], [], []>} : vector<8x4xf32>, vector<4x128xf32>, vector<8x128xf32> -> vector<8x128xf32>
    %c0_3 = arith.constant 0 : index
    %c0_4 = arith.constant 0 : index
    %3 = vector.load %arg3[%c0_3, %c0_4] : memref<1x128xf32, #tpu.memory_space<vmem>>, vector<1x128xf32>
    %4 = vector.broadcast %3 : vector<1x128xf32> to vector<8x128xf32>
    %5 = arith.addf %2, %4 : vector<8x128xf32>
    %c0_5 = arith.constant 0 : index
    %c0_6 = arith.constant 0 : index
    %6 = vector.load %arg7[%c0_5, %c0_6] : memref<8x128xf32, #tpu.memory_space<vmem>>, vector<8x128xf32>
    tpu.vector_store %arg7[%c0_5, %c0_6], %5 {strides = array<i32>} : memref<8x128xf32, #tpu.memory_space<vmem>>, vector<8x128xf32>,
    %c0_7 = arith.constant 0 : index
    %c0_8 = arith.constant 0 : index
    %7 = vector.load %arg2[%c0_7, %c0_8] : memref<32x128xf32, #tpu.memory_space<vmem>>, vector<32x128xf32>
    %8 = tpu.iota {dimensions = array<i32: 1>} : vector<1x128xi32>
    %c64_i32 = arith.constant 64 : i32
    %9 = vector.broadcast %c64_i32 : i32 to vector<1x128xi32>
    %10 = arith.cmpi sge, %8, %9 : vector<1x128xi32>
    %c96_i32 = arith.constant 96 : i32
    %11 = vector.broadcast %c96_i32 : i32 to vector<1x128xi32>
    %12 = arith.cmpi slt, %8, %11 : vector<1x128xi32>
    %13 = arith.andi %10, %12 : vector<1x128xi1>
    %cst_9 = arith.constant 1.000000e+00 : f32
    %cst_10 = arith.constant 5.000000e-01 : f32
    %14 = vector.broadcast %cst_9 : f32 to vector<1x128xf32>
    %15 = vector.broadcast %cst_10 : f32 to vector<1x128xf32>
    %16 = arith.select %13, %14, %15 : vector<1x128xi1>, vector<1x128xf32>
    %cst_11 = arith.constant 0.000000e+00 : f32
    %cst_12 = arith.constant 5.000000e-01 : f32
    %17 = vector.broadcast %cst_11 : f32 to vector<1x128xf32>
    %18 = vector.broadcast %cst_12 : f32 to vector<1x128xf32>
    %19 = arith.select %13, %17, %18 : vector<1x128xi1>, vector<1x128xf32>
    %cst_13 = arith.constant 0.000000e+00 : f32
    %20 = vector.broadcast %cst_13 : f32 to vector<1x32xf32>
    %cst_14 = arith.constant 0.000000e+00 : f32
    %21 = vector.broadcast %cst_14 : f32 to vector<1x32xf32>
    %c0_i32 = arith.constant 0 : i32
    %22 = arith.index_cast %c0_i32 : i32 to index
    %c0_15 = arith.constant 0 : index
    %23 = vector.load %arg7[%22, %c0_15] : memref<8x128xf32, #tpu.memory_space<vmem>>, vector<1x128xf32>
    %cst_16 = arith.constant dense<0.000000e+00> : vector<1x128xf32>
    %24 = tpu.matmul %20, %7, %cst_16 {dimension_numbers = #tpu.dot_dimension_numbers<[1], [0], [0], [1], [0, 0, 1, 1], [], []>} : vector<1x32xf32>, vector<32x128xf32>, vector<1x128xf32> -> vector<1x128xf32>
    %25 = arith.addf %23, %24 : vector<1x128xf32>
    %26 = arith.mulf %25, %16 : vector<1x128xf32>
    %27 = math.tanh %26 : vector<1x128xf32>
    %28 = arith.mulf %27, %16 : vector<1x128xf32>
    %29 = arith.addf %28, %19 : vector<1x128xf32>
    %30 = vector.extract_strided_slice %29 {offsets = [0, 0], sizes = [1, 32], strides = [1, 1]} : vector<1x128xf32> to vector<1x32xf32>
    %31 = vector.extract_strided_slice %29 {offsets = [0, 32], sizes = [1, 32], strides = [1, 1]} : vector<1x128xf32> to vector<1x32xf32>
    %32 = vector.extract_strided_slice %29 {offsets = [0, 64], sizes = [1, 32], strides = [1, 1]} : vector<1x128xf32> to vector<1x32xf32>
    %33 = vector.extract_strided_slice %29 {offsets = [0, 96], sizes = [1, 32], strides = [1, 1]} : vector<1x128xf32> to vector<1x32xf32>
    %34 = arith.mulf %31, %21 : vector<1x32xf32>
    %35 = arith.mulf %30, %32 : vector<1x32xf32>
    %36 = arith.addf %34, %35 : vector<1x32xf32>
    %37 = math.tanh %36 : vector<1x32xf32>
    %38 = arith.mulf %33, %37 : vector<1x32xf32>
    %c1_i32 = arith.constant 1 : i32
    %39 = arith.index_cast %c1_i32 : i32 to index
    %c0_17 = arith.constant 0 : index
    %40 = vector.load %arg7[%39, %c0_17] : memref<8x128xf32, #tpu.memory_space<vmem>>, vector<1x128xf32>
    %cst_18 = arith.constant dense<0.000000e+00> : vector<1x128xf32>
    %41 = tpu.matmul %38, %7, %cst_18 {dimension_numbers = #tpu.dot_dimension_numbers<[1], [0], [0], [1], [0, 0, 1, 1], [], []>} : vector<1x32xf32>, vector<32x128xf32>, vector<1x128xf32> -> vector<1x128xf32>
    %42 = arith.addf %40, %41 : vector<1x128xf32>
    %43 = arith.mulf %42, %16 : vector<1x128xf32>
    %44 = math.tanh %43 : vector<1x128xf32>
    %45 = arith.mulf %44, %16 : vector<1x128xf32>
    %46 = arith.addf %45, %19 : vector<1x128xf32>
    %47 = vector.extract_strided_slice %46 {offsets = [0, 0], sizes = [1, 32], strides = [1, 1]} : vector<1x128xf32> to vector<1x32xf32>
    %48 = vector.extract_strided_slice %46 {offsets = [0, 32], sizes = [1, 32], strides = [1, 1]} : vector<1x128xf32> to vector<1x32xf32>
    %49 = vector.extract_strided_slice %46 {offsets = [0, 64], sizes = [1, 32], strides = [1, 1]} : vector<1x128xf32> to vector<1x32xf32>
    %50 = vector.extract_strided_slice %46 {offsets = [0, 96], sizes = [1, 32], strides = [1, 1]} : vector<1x128xf32> to vector<1x32xf32>
    %51 = arith.mulf %48, %36 : vector<1x32xf32>
    %52 = arith.mulf %47, %49 : vector<1x32xf32>
    %53 = arith.addf %51, %52 : vector<1x32xf32>
    %54 = math.tanh %53 : vector<1x32xf32>
    %55 = arith.mulf %50, %54 : vector<1x32xf32>
    %c2_i32 = arith.constant 2 : i32
    %56 = arith.index_cast %c2_i32 : i32 to index
    %c0_19 = arith.constant 0 : index
    %57 = vector.load %arg7[%56, %c0_19] : memref<8x128xf32, #tpu.memory_space<vmem>>, vector<1x128xf32>
    %cst_20 = arith.constant dense<0.000000e+00> : vector<1x128xf32>
    %58 = tpu.matmul %55, %7, %cst_20 {dimension_numbers = #tpu.dot_dimension_numbers<[1], [0], [0], [1], [0, 0, 1, 1], [], []>} : vector<1x32xf32>, vector<32x128xf32>, vector<1x128xf32> -> vector<1x128xf32>
    %59 = arith.addf %57, %58 : vector<1x128xf32>
    %60 = arith.mulf %59, %16 : vector<1x128xf32>
    %61 = math.tanh %60 : vector<1x128xf32>
    %62 = arith.mulf %61, %16 : vector<1x128xf32>
    %63 = arith.addf %62, %19 : vector<1x128xf32>
    %64 = vector.extract_strided_slice %63 {offsets = [0, 0], sizes = [1, 32], strides = [1, 1]} : vector<1x128xf32> to vector<1x32xf32>
    %65 = vector.extract_strided_slice %63 {offsets = [0, 32], sizes = [1, 32], strides = [1, 1]} : vector<1x128xf32> to vector<1x32xf32>
    %66 = vector.extract_strided_slice %63 {offsets = [0, 64], sizes = [1, 32], strides = [1, 1]} : vector<1x128xf32> to vector<1x32xf32>
    %67 = vector.extract_strided_slice %63 {offsets = [0, 96], sizes = [1, 32], strides = [1, 1]} : vector<1x128xf32> to vector<1x32xf32>
    %68 = arith.mulf %65, %53 : vector<1x32xf32>
    %69 = arith.mulf %64, %66 : vector<1x32xf32>
    %70 = arith.addf %68, %69 : vector<1x32xf32>
    %71 = math.tanh %70 : vector<1x32xf32>
    %72 = arith.mulf %67, %71 : vector<1x32xf32>
    %c3_i32 = arith.constant 3 : i32
    %73 = arith.index_cast %c3_i32 : i32 to index
    %c0_21 = arith.constant 0 : index
    %74 = vector.load %arg7[%73, %c0_21] : memref<8x128xf32, #tpu.memory_space<vmem>>, vector<1x128xf32>
    %cst_22 = arith.constant dense<0.000000e+00> : vector<1x128xf32>
    %75 = tpu.matmul %72, %7, %cst_22 {dimension_numbers = #tpu.dot_dimension_numbers<[1], [0], [0], [1], [0, 0, 1, 1], [], []>} : vector<1x32xf32>, vector<32x128xf32>, vector<1x128xf32> -> vector<1x128xf32>
    %76 = arith.addf %74, %75 : vector<1x128xf32>
    %77 = arith.mulf %76, %16 : vector<1x128xf32>
    %78 = math.tanh %77 : vector<1x128xf32>
    %79 = arith.mulf %78, %16 : vector<1x128xf32>
    %80 = arith.addf %79, %19 : vector<1x128xf32>
    %81 = vector.extract_strided_slice %80 {offsets = [0, 0], sizes = [1, 32], strides = [1, 1]} : vector<1x128xf32> to vector<1x32xf32>
    %82 = vector.extract_strided_slice %80 {offsets = [0, 32], sizes = [1, 32], strides = [1, 1]} : vector<1x128xf32> to vector<1x32xf32>
    %83 = vector.extract_strided_slice %80 {offsets = [0, 64], sizes = [1, 32], strides = [1, 1]} : vector<1x128xf32> to vector<1x32xf32>
    %84 = vector.extract_strided_slice %80 {offsets = [0, 96], sizes = [1, 32], strides = [1, 1]} : vector<1x128xf32> to vector<1x32xf32>
    %85 = arith.mulf %82, %70 : vector<1x32xf32>
    %86 = arith.mulf %81, %83 : vector<1x32xf32>
    %87 = arith.addf %85, %86 : vector<1x32xf32>
    %88 = math.tanh %87 : vector<1x32xf32>
    %89 = arith.mulf %84, %88 : vector<1x32xf32>
    %c4_i32 = arith.constant 4 : i32
    %90 = arith.index_cast %c4_i32 : i32 to index
    %c0_23 = arith.constant 0 : index
    %91 = vector.load %arg7[%90, %c0_23] : memref<8x128xf32, #tpu.memory_space<vmem>>, vector<1x128xf32>
    %cst_24 = arith.constant dense<0.000000e+00> : vector<1x128xf32>
    %92 = tpu.matmul %89, %7, %cst_24 {dimension_numbers = #tpu.dot_dimension_numbers<[1], [0], [0], [1], [0, 0, 1, 1], [], []>} : vector<1x32xf32>, vector<32x128xf32>, vector<1x128xf32> -> vector<1x128xf32>
    %93 = arith.addf %91, %92 : vector<1x128xf32>
    %94 = arith.mulf %93, %16 : vector<1x128xf32>
    %95 = math.tanh %94 : vector<1x128xf32>
    %96 = arith.mulf %95, %16 : vector<1x128xf32>
    %97 = arith.addf %96, %19 : vector<1x128xf32>
    %98 = vector.extract_strided_slice %97 {offsets = [0, 0], sizes = [1, 32], strides = [1, 1]} : vector<1x128xf32> to vector<1x32xf32>
    %99 = vector.extract_strided_slice %97 {offsets = [0, 32], sizes = [1, 32], strides = [1, 1]} : vector<1x128xf32> to vector<1x32xf32>
    %100 = vector.extract_strided_slice %97 {offsets = [0, 64], sizes = [1, 32], strides = [1, 1]} : vector<1x128xf32> to vector<1x32xf32>
    %101 = vector.extract_strided_slice %97 {offsets = [0, 96], sizes = [1, 32], strides = [1, 1]} : vector<1x128xf32> to vector<1x32xf32>
    %102 = arith.mulf %99, %87 : vector<1x32xf32>
    %103 = arith.mulf %98, %100 : vector<1x32xf32>
    %104 = arith.addf %102, %103 : vector<1x32xf32>
    %105 = math.tanh %104 : vector<1x32xf32>
    %106 = arith.mulf %101, %105 : vector<1x32xf32>
    %c5_i32 = arith.constant 5 : i32
    %107 = arith.index_cast %c5_i32 : i32 to index
    %c0_25 = arith.constant 0 : index
    %108 = vector.load %arg7[%107, %c0_25] : memref<8x128xf32, #tpu.memory_space<vmem>>, vector<1x128xf32>
    %cst_26 = arith.constant dense<0.000000e+00> : vector<1x128xf32>
    %109 = tpu.matmul %106, %7, %cst_26 {dimension_numbers = #tpu.dot_dimension_numbers<[1], [0], [0], [1], [0, 0, 1, 1], [], []>} : vector<1x32xf32>, vector<32x128xf32>, vector<1x128xf32> -> vector<1x128xf32>
    %110 = arith.addf %108, %109 : vector<1x128xf32>
    %111 = arith.mulf %110, %16 : vector<1x128xf32>
    %112 = math.tanh %111 : vector<1x128xf32>
    %113 = arith.mulf %112, %16 : vector<1x128xf32>
    %114 = arith.addf %113, %19 : vector<1x128xf32>
    %115 = vector.extract_strided_slice %114 {offsets = [0, 0], sizes = [1, 32], strides = [1, 1]} : vector<1x128xf32> to vector<1x32xf32>
    %116 = vector.extract_strided_slice %114 {offsets = [0, 32], sizes = [1, 32], strides = [1, 1]} : vector<1x128xf32> to vector<1x32xf32>
    %117 = vector.extract_strided_slice %114 {offsets = [0, 64], sizes = [1, 32], strides = [1, 1]} : vector<1x128xf32> to vector<1x32xf32>
    %118 = vector.extract_strided_slice %114 {offsets = [0, 96], sizes = [1, 32], strides = [1, 1]} : vector<1x128xf32> to vector<1x32xf32>
    %119 = arith.mulf %116, %104 : vector<1x32xf32>
    %120 = arith.mulf %115, %117 : vector<1x32xf32>
    %121 = arith.addf %119, %120 : vector<1x32xf32>
    %122 = math.tanh %121 : vector<1x32xf32>
    %123 = arith.mulf %118, %122 : vector<1x32xf32>
    %c6_i32 = arith.constant 6 : i32
    %124 = arith.index_cast %c6_i32 : i32 to index
    %c0_27 = arith.constant 0 : index
    %125 = vector.load %arg7[%124, %c0_27] : memref<8x128xf32, #tpu.memory_space<vmem>>, vector<1x128xf32>
    %cst_28 = arith.constant dense<0.000000e+00> : vector<1x128xf32>
    %126 = tpu.matmul %123, %7, %cst_28 {dimension_numbers = #tpu.dot_dimension_numbers<[1], [0], [0], [1], [0, 0, 1, 1], [], []>} : vector<1x32xf32>, vector<32x128xf32>, vector<1x128xf32> -> vector<1x128xf32>
    %127 = arith.addf %125, %126 : vector<1x128xf32>
    %128 = arith.mulf %127, %16 : vector<1x128xf32>
    %129 = math.tanh %128 : vector<1x128xf32>
    %130 = arith.mulf %129, %16 : vector<1x128xf32>
    %131 = arith.addf %130, %19 : vector<1x128xf32>
    %132 = vector.extract_strided_slice %131 {offsets = [0, 0], sizes = [1, 32], strides = [1, 1]} : vector<1x128xf32> to vector<1x32xf32>
    %133 = vector.extract_strided_slice %131 {offsets = [0, 32], sizes = [1, 32], strides = [1, 1]} : vector<1x128xf32> to vector<1x32xf32>
    %134 = vector.extract_strided_slice %131 {offsets = [0, 64], sizes = [1, 32], strides = [1, 1]} : vector<1x128xf32> to vector<1x32xf32>
    %135 = vector.extract_strided_slice %131 {offsets = [0, 96], sizes = [1, 32], strides = [1, 1]} : vector<1x128xf32> to vector<1x32xf32>
    %136 = arith.mulf %133, %121 : vector<1x32xf32>
    %137 = arith.mulf %132, %134 : vector<1x32xf32>
    %138 = arith.addf %136, %137 : vector<1x32xf32>
    %139 = math.tanh %138 : vector<1x32xf32>
    %140 = arith.mulf %135, %139 : vector<1x32xf32>
    %c7_i32 = arith.constant 7 : i32
    %141 = arith.index_cast %c7_i32 : i32 to index
    %c0_29 = arith.constant 0 : index
    %142 = vector.load %arg7[%141, %c0_29] : memref<8x128xf32, #tpu.memory_space<vmem>>, vector<1x128xf32>
    %cst_30 = arith.constant dense<0.000000e+00> : vector<1x128xf32>
    %143 = tpu.matmul %140, %7, %cst_30 {dimension_numbers = #tpu.dot_dimension_numbers<[1], [0], [0], [1], [0, 0, 1, 1], [], []>} : vector<1x32xf32>, vector<32x128xf32>, vector<1x128xf32> -> vector<1x128xf32>
    %144 = arith.addf %142, %143 : vector<1x128xf32>
    %145 = arith.mulf %144, %16 : vector<1x128xf32>
    %146 = math.tanh %145 : vector<1x128xf32>
    %147 = arith.mulf %146, %16 : vector<1x128xf32>
    %148 = arith.addf %147, %19 : vector<1x128xf32>
    %149 = vector.extract_strided_slice %148 {offsets = [0, 0], sizes = [1, 32], strides = [1, 1]} : vector<1x128xf32> to vector<1x32xf32>
    %150 = vector.extract_strided_slice %148 {offsets = [0, 32], sizes = [1, 32], strides = [1, 1]} : vector<1x128xf32> to vector<1x32xf32>
    %151 = vector.extract_strided_slice %148 {offsets = [0, 64], sizes = [1, 32], strides = [1, 1]} : vector<1x128xf32> to vector<1x32xf32>
    %152 = vector.extract_strided_slice %148 {offsets = [0, 96], sizes = [1, 32], strides = [1, 1]} : vector<1x128xf32> to vector<1x32xf32>
    %153 = arith.mulf %150, %138 : vector<1x32xf32>
    %154 = arith.mulf %149, %151 : vector<1x32xf32>
    %155 = arith.addf %153, %154 : vector<1x32xf32>
    %156 = math.tanh %155 : vector<1x32xf32>
    %157 = arith.mulf %152, %156 : vector<1x32xf32>
    %c8_i32 = arith.constant 8 : i32
    %c0_31 = arith.constant 0 : index
    %c0_32 = arith.constant 0 : index
    %158 = vector.load %arg4[%c0_31, %c0_32] : memref<32x1xf32, #tpu.memory_space<vmem>>, vector<32x1xf32>
    %cst_33 = arith.constant dense<0.000000e+00> : vector<1x1xf32>
    %159 = tpu.matmul %157, %158, %cst_33 {dimension_numbers = #tpu.dot_dimension_numbers<[1], [0], [0], [1], [0, 0, 1, 1], [], []>} : vector<1x32xf32>, vector<32x1xf32>, vector<1x1xf32> -> vector<1x1xf32>
    %c0_34 = arith.constant 0 : index
    %c0_35 = arith.constant 0 : index
    %160 = vector.load %arg5[%c0_34, %c0_35] : memref<1x1xf32, #tpu.memory_space<vmem>>, vector<1x1xf32>
    %161 = arith.addf %159, %160 : vector<1x1xf32>
    %c0_36 = arith.constant 0 : index
    %c0_37 = arith.constant 0 : index
    %162 = vector.load %arg6[%c0_36, %c0_37] : memref<1x1xf32, #tpu.memory_space<vmem>>, vector<1x1xf32>
    tpu.vector_store %arg6[%c0_36, %c0_37], %161 {strides = array<i32>} : memref<1x1xf32, #tpu.memory_space<vmem>>, vector<1x1xf32>,
    return
  }
}

</mosaic_0001>

<llo_original>
// kernel: tpu_custom_call.1
$region0: #{tpu_custom_call.1}
  #allocation0 [shape = 'u32[]', space=smem, size = 0x4, offset = 0x4, fixed_abs, tag = 'smem constant byte address 0x4 - core index']
  #allocation1 [shape = 'u32[144,128]{1,0:T(1,128)}', space=vmem, size = 0x12000, scoped, tag = 'internal scratch']
  #allocation2 [shape = 'f32[8,128]{1,0:T(8,128)}', space=vmem, size = 0x1000, scoped, tag = 'scratch operand']
  #allocation3 [shape = 'f32[1,1]{1,0:T(1,128)S(1)}', space=vmem, size = 0x200, scoped, tag = 'scoped memory for tpu_custom_call.1']
  %s0 = inlined_call_operand.vmem [shape: f32[8,4], index: 0, kind: input, shape index: {}]
  %s1 = inlined_call_operand.vmem [shape: f32[4,128], index: 1, kind: input, shape index: {}]
  %s2 = inlined_call_operand.vmem [shape: f32[32,128], index: 2, kind: input, shape index: {}]
  %s3 = inlined_call_operand.vmem [shape: f32[1,128], index: 3, kind: input, shape index: {}]
  %s4 = inlined_call_operand.vmem [shape: f32[32,1], index: 4, kind: input, shape index: {}]
  %s5 = inlined_call_operand.<no memory space> [shape: f32[1,1], index: 5, kind: input, shape index: {}]
  %s6 = inlined_call_operand.hbm [shape: f32[1,1], index: 6, kind: output, shape index: {}]
  %s7 = sld [smem:[#allocation0]]
  $region34: #{tpu_custom_call.1} parent=0
    _
  %s9 = ssub.s32 1, %s7
  %s10 = scalar_select 0, %s9, %s7
  %v11 = vstv %s5
  %12 = vst [vmem:[#allocation3] sm:$0x1] %v11
  $region1: #{tpu_custom_call.1} parent=0
    #allocation4 [shape = 'u8[512]{0}', space=vmem, size = 0x400, scoped, tag = 'output window, operand 0, single buffered']
    #allocation5 [shape = 's32[1]{0}', space=sflag, size = 0x4, scoped, tag = 'scoped memory for tpu_custom_call.1']
    %13 = vsyncpa [#allocation5], 0
    // Predicated region
    $region2: #{tpu_custom_call.1} parent=1 // pred_check
      _
    $region3: #{tpu_custom_call.1} parent=1 // pred_check_branch
      %15 = sbr.rel (0) target = $region5
    $region4: #{tpu_custom_call.1} parent=1 // pred_region
      _
    $region5: #{tpu_custom_call.1} parent=1 // pred_fallthru
      _
    // Predicated region
    $region6: #{tpu_custom_call.1} parent=1 // pred_check
      _
    $region7: #{tpu_custom_call.1} parent=1 // pred_check_branch
      %17 = sbr.rel (0) target = $region9
    $region8: #{tpu_custom_call.1} parent=1 // pred_region
      _
    $region9: #{tpu_custom_call.1} parent=1 // pred_fallthru
      _
    // Predicated region
    $region10: #{tpu_custom_call.1} parent=1 // pred_check
      _
    $region11: #{tpu_custom_call.1} parent=1 // pred_check_branch
      %19 = sbr.rel (0) target = $region13
    $region12: #{tpu_custom_call.1} parent=1 // pred_region
      _
    $region13: #{tpu_custom_call.1} parent=1 // pred_fallthru
      _
    // Predicated region
    $region14: #{tpu_custom_call.1} parent=1 // pred_check
      _
    $region15: #{tpu_custom_call.1} parent=1 // pred_check_branch
      %21 = sbr.rel (0) target = $region17
    $region16: #{tpu_custom_call.1} parent=1 // pred_region
      _
    $region17: #{tpu_custom_call.1} parent=1 // pred_fallthru
      _
    // Predicated region
    $region18: #{tpu_custom_call.1} parent=1 // pred_check
      _
    $region19: #{tpu_custom_call.1} parent=1 // pred_check_branch
      %23 = sbr.rel (0) target = $region21
    $region20: #{tpu_custom_call.1} parent=1 // pred_region
      _
    $region21: #{tpu_custom_call.1} parent=1 // pred_fallthru
      _
    // Predicated region
    $region22: #{tpu_custom_call.1} parent=1 // pred_check
      _
    $region23: #{tpu_custom_call.1} parent=1 // pred_check_branch
      %25 = sbr.rel (0) target = $region25
    $region24: #{tpu_custom_call.1} parent=1 // pred_region
      _
    $region25: #{tpu_custom_call.1} parent=1 // pred_fallthru
      _
    %v26 = vld [vmem:[%s0] sm:$0xff]
    %v27 = vld [vmem:[%s1] sm:$0xf]
    %v28 = vld [vmem:[%s3] sm:$0x1]
    %v30 = vlaneseq
    %v31 = vshrl.u32 %v30, 7
    %v32 = vsub.s32 0, %v31
    %v33 = vrot.slane %v28, %v32
    %vm35 = vcmask 31744
    %v37 = vsel %vm35, %v26, 0
    %vm39 = vcmask 1043456
    %v41 = vsel %vm39, %v27, 0
    %43 = vmatprep.subr.mxu0 0.0
    %44 = vmatpush1.msra.mxu0 0.0
    %45 = vmatprep.subr.mxu0 0.0
    %46 = vmatpush1.msra.mxu0 0.0
    %47 = vmatprep.subr.mxu0 0.0
    %48 = vmatpush1.msra.mxu0 0.0
    %49 = vmatprep.subr.mxu0 0.0
    %50 = vmatpush1.msra.mxu0 0.0
    %51 = vmatprep.subr.mxu0 0.0
    %52 = vmatpush1.msra.mxu0 0.0
    %53 = vmatprep.subr.mxu0 0.0
    %54 = vmatpush1.msra.mxu0 0.0
    %55 = vmatprep.subr.mxu0 0.0
    %56 = vmatpush1.msra.mxu0 0.0
    %57 = vmatprep.subr.mxu0 0.0
    %58 = vmatpush1.msra.mxu0 0.0
    %59 = vmatprep.subr.mxu0 0.0
    %60 = vmatpush1.msra.mxu0 0.0
    %61 = vmatprep.subr.mxu0 0.0
    %62 = vmatpush1.msra.mxu0 0.0
    %63 = vmatprep.subr.mxu0 0.0
    %64 = vmatpush1.msra.mxu0 0.0
    %65 = vmatprep.subr.mxu0 0.0
    %66 = vmatpush1.msra.mxu0 0.0
    %67 = vmatprep.subr.mxu0 0.0
    %68 = vmatpush1.msra.mxu0 0.0
    %69 = vmatprep.subr.mxu0 0.0
    %70 = vmatpush1.msra.mxu0 0.0
    %71 = vmatprep.subr.mxu0 0.0
    %72 = vmatpush1.msra.mxu0 0.0
    %73 = vmatprep.subr.mxu0 0.0
    %74 = vmatpush1.msra.mxu0 %v41
    %75 = vmatprep.subr.mxu0 0.0
    %76 = vmatpush2.msra.mxu0 0.0
    %77 = vmatprep.subr.mxu0 0.0
    %78 = vmatpush2.msra.mxu0 0.0
    %79 = vmatprep.subr.mxu0 0.0
    %80 = vmatpush2.msra.mxu0 0.0
    %81 = vmatprep.subr.mxu0 0.0
    %82 = vmatpush2.msra.mxu0 0.0
    %83 = vmatprep.subr.mxu0 0.0
    %84 = vmatpush2.msra.mxu0 0.0
    %85 = vmatprep.subr.mxu0 0.0
    %86 = vmatpush2.msra.mxu0 0.0
    %87 = vmatprep.subr.mxu0 0.0
    %88 = vmatpush2.msra.mxu0 0.0
    %89 = vmatprep.subr.mxu0 0.0
    %90 = vmatpush2.msra.mxu0 0.0
    %91 = vmatprep.subr.mxu0 0.0
    %92 = vmatpush2.msra.mxu0 0.0
    %93 = vmatprep.subr.mxu0 0.0
    %94 = vmatpush2.msra.mxu0 0.0
    %95 = vmatprep.subr.mxu0 0.0
    %96 = vmatpush2.msra.mxu0 0.0
    %97 = vmatprep.subr.mxu0 0.0
    %98 = vmatpush2.msra.mxu0 0.0
    %99 = vmatprep.subr.mxu0 0.0
    %100 = vmatpush2.msra.mxu0 0.0
    %101 = vmatprep.subr.mxu0 0.0
    %102 = vmatpush2.msra.mxu0 0.0
    %103 = vmatprep.subr.mxu0 0.0
    %104 = vmatpush2.msra.mxu0 0.0
    %105 = vmatprep.subr.mxu0 0.0
    %106 = vmatpush2.msra.mxu0 0.0
    %107 = vmatprep.mubr.f32.mxu0 0.0
    %108 = vmatmul.mubr.f32.gmra.mxu0 %v37
    %v109 = vpop.f32.mrf.mxu0
    %v110 = vadd.f32 %v33, %v109
    %v111 = vpop.f32.mrf.mxu0
    %112 = vdwg.mxu0
    %113 = vst [vmem:[#allocation2] sm:$0xff] %v110
    %v114 = vld [vmem:[%s2] sm:$0xff]
    %v115 = vld [vmem:[%s2 + $0x8] sm:$0xff]
    %v116 = vld [vmem:[%s2 + $0x10] sm:$0xff]
    %v117 = vld [vmem:[%s2 + $0x18] sm:$0xff]
    %v118 = vlaneseq
    %v119 = vand.u32 %v118, 127
    %vm120 = vcmp.ge.s32.totalorder %v119, 64
    %vm121 = vcmp.lt.s32.totalorder %v119, 96
    %vm122 = vmand %vm120, %vm121
    %v123 = vsel %vm122, 1.0, 0.5
    %v124 = vsel %vm122, 0.0, 0.5
    %v125 = vld [vmem:[#allocation2] sm:$0x1]
    %vm126 = vcmask 261120
    %v128 = vsel %vm126, 0.0, 0
    %130 = vmatprep.subr.mxu0 0.0
    %131 = vmatpush1.msra.mxu0 0.0
    %132 = vmatprep.subr.mxu0 0.0
    %133 = vmatpush1.msra.mxu0 0.0
    %134 = vmatprep.subr.mxu0 0.0
    %135 = vmatpush1.msra.mxu0 0.0
    %136 = vmatprep.subr.mxu0 0.0
    %137 = vmatpush1.msra.mxu0 0.0
    %138 = vmatprep.subr.mxu0 0.0
    %139 = vmatpush1.msra.mxu0 0.0
    %140 = vmatprep.subr.mxu0 0.0
    %141 = vmatpush1.msra.mxu0 0.0
    %142 = vmatprep.subr.mxu0 0.0
    %143 = vmatpush1.msra.mxu0 0.0
    %144 = vmatprep.subr.mxu0 0.0
    %145 = vmatpush1.msra.mxu0 0.0
    %146 = vmatprep.subr.mxu0 0.0
    %147 = vmatpush1.msra.mxu0 0.0
    %148 = vmatprep.subr.mxu0 0.0
    %149 = vmatpush1.msra.mxu0 0.0
    %150 = vmatprep.subr.mxu0 0.0
    %151 = vmatpush1.msra.mxu0 0.0
    %152 = vmatprep.subr.mxu0 0.0
    %153 = vmatpush1.msra.mxu0 0.0
    %154 = vmatprep.subr.mxu0 0.0
    %155 = vmatpush1.msra.mxu0 %v117
    %156 = vmatprep.subr.mxu0 0.0
    %157 = vmatpush1.msra.mxu0 %v116
    %158 = vmatprep.subr.mxu0 0.0
    %159 = vmatpush1.msra.mxu0 %v115
    %160 = vmatprep.subr.mxu0 0.0
    %161 = vmatpush1.msra.mxu0 %v114
    %162 = vmatprep.subr.mxu0 0.0
    %163 = vmatpush2.msra.mxu0 0.0
    %164 = vmatprep.subr.mxu0 0.0
    %165 = vmatpush2.msra.mxu0 0.0
    %166 = vmatprep.subr.mxu0 0.0
    %167 = vmatpush2.msra.mxu0 0.0
    %168 = vmatprep.subr.mxu0 0.0
    %169 = vmatpush2.msra.mxu0 0.0
    %170 = vmatprep.subr.mxu0 0.0
    %171 = vmatpush2.msra.mxu0 0.0
    %172 = vmatprep.subr.mxu0 0.0
    %173 = vmatpush2.msra.mxu0 0.0
    %174 = vmatprep.subr.mxu0 0.0
    %175 = vmatpush2.msra.mxu0 0.0
    %176 = vmatprep.subr.mxu0 0.0
    %177 = vmatpush2.msra.mxu0 0.0
    %178 = vmatprep.subr.mxu0 0.0
    %179 = vmatpush2.msra.mxu0 0.0
    %180 = vmatprep.subr.mxu0 0.0
    %181 = vmatpush2.msra.mxu0 0.0
    %182 = vmatprep.subr.mxu0 0.0
    %183 = vmatpush2.msra.mxu0 0.0
    %184 = vmatprep.subr.mxu0 0.0
    %185 = vmatpush2.msra.mxu0 0.0
    %186 = vmatprep.subr.mxu0 0.0
    %187 = vmatpush2.msra.mxu0 0.0
    %188 = vmatprep.subr.mxu0 0.0
    %189 = vmatpush2.msra.mxu0 0.0
    %190 = vmatprep.subr.mxu0 0.0
    %191 = vmatpush2.msra.mxu0 0.0
    %192 = vmatprep.subr.mxu0 0.0
    %193 = vmatpush2.msra.mxu0 0.0
    %194 = vmatprep.mubr.f32.mxu0 0.0
    %195 = vmatmul.mubr.f32.gmra.mxu0 %v128
    %v196 = vpop.f32.mrf.mxu0
    %v197 = vadd.f32 0.0, %v196
    %v198 = vpop.f32.mrf.mxu0
    %199 = vdwg.mxu0
    %v200 = vadd.f32 %v125, %v197
    %v201 = vmul.f32 %v200, %v123
    %v202 = vtanh.pop %v201
    %v203 = vmul.f32 %v202, %v123
    %v204 = vadd.f32 %v203, %v124
    %v205 = vmul.f32 %v204, 0.0
    %207 = vrot.lane.b32.xlu0 %v204, 64
    %v208 = vpop.permute.xlu0 %207
    %v210 = vmul.f32 %v204, %v208
    %212 = vrot.lane.b32.xlu0 %v210, 32
    %v213 = vpop.permute.xlu0 %212
    %v215 = vadd.f32 %v205, %v213
    %v216 = vtanh.pop %v215
    %218 = vrot.lane.b32.xlu0 %v216, 64
    %v219 = vpop.permute.xlu0 %218
    %v221 = vmul.f32 %v204, %v219
    %v222 = vld [vmem:[#allocation2 + $0x1] sm:$0x1]
    %224 = vrot.lane.b32.xlu0 %v221, 32
    %v225 = vpop.permute.xlu0 %224
    %v226 = vsel %vm126, %v225, 0
    %228 = vmatprep.subr.mxu0 0.0
    %229 = vmatpush1.msra.mxu0 0.0
    %230 = vmatprep.subr.mxu0 0.0
    %231 = vmatpush1.msra.mxu0 0.0
    %232 = vmatprep.subr.mxu0 0.0
    %233 = vmatpush1.msra.mxu0 0.0
    %234 = vmatprep.subr.mxu0 0.0
    %235 = vmatpush1.msra.mxu0 0.0
    %236 = vmatprep.subr.mxu0 0.0
    %237 = vmatpush1.msra.mxu0 0.0
    %238 = vmatprep.subr.mxu0 0.0
    %239 = vmatpush1.msra.mxu0 0.0
    %240 = vmatprep.subr.mxu0 0.0
    %241 = vmatpush1.msra.mxu0 0.0
    %242 = vmatprep.subr.mxu0 0.0
    %243 = vmatpush1.msra.mxu0 0.0
    %244 = vmatprep.subr.mxu0 0.0
    %245 = vmatpush1.msra.mxu0 0.0
    %246 = vmatprep.subr.mxu0 0.0
    %247 = vmatpush1.msra.mxu0 0.0
    %248 = vmatprep.subr.mxu0 0.0
    %249 = vmatpush1.msra.mxu0 0.0
    %250 = vmatprep.subr.mxu0 0.0
    %251 = vmatpush1.msra.mxu0 0.0
    %252 = vmatprep.subr.mxu0 0.0
    %253 = vmatpush1.msra.mxu0 %v117
    %254 = vmatprep.subr.mxu0 0.0
    %255 = vmatpush1.msra.mxu0 %v116
    %256 = vmatprep.subr.mxu0 0.0
    %257 = vmatpush1.msra.mxu0 %v115
    %258 = vmatprep.subr.mxu0 0.0
    %259 = vmatpush1.msra.mxu0 %v114
    %260 = vmatprep.subr.mxu0 0.0
    %261 = vmatpush2.msra.mxu0 0.0
    %262 = vmatprep.subr.mxu0 0.0
    %263 = vmatpush2.msra.mxu0 0.0
    %264 = vmatprep.subr.mxu0 0.0
    %265 = vmatpush2.msra.mxu0 0.0
    %266 = vmatprep.subr.mxu0 0.0
    %267 = vmatpush2.msra.mxu0 0.0
    %268 = vmatprep.subr.mxu0 0.0
    %269 = vmatpush2.msra.mxu0 0.0
    %270 = vmatprep.subr.mxu0 0.0
    %271 = vmatpush2.msra.mxu0 0.0
    %272 = vmatprep.subr.mxu0 0.0
    %273 = vmatpush2.msra.mxu0 0.0
    %274 = vmatprep.subr.mxu0 0.0
    %275 = vmatpush2.msra.mxu0 0.0
    %276 = vmatprep.subr.mxu0 0.0
    %277 = vmatpush2.msra.mxu0 0.0
    %278 = vmatprep.subr.mxu0 0.0
    %279 = vmatpush2.msra.mxu0 0.0
    %280 = vmatprep.subr.mxu0 0.0
    %281 = vmatpush2.msra.mxu0 0.0
    %282 = vmatprep.subr.mxu0 0.0
    %283 = vmatpush2.msra.mxu0 0.0
    %284 = vmatprep.subr.mxu0 0.0
    %285 = vmatpush2.msra.mxu0 0.0
    %286 = vmatprep.subr.mxu0 0.0
    %287 = vmatpush2.msra.mxu0 0.0
    %288 = vmatprep.subr.mxu0 0.0
    %289 = vmatpush2.msra.mxu0 0.0
    %290 = vmatprep.subr.mxu0 0.0
    %291 = vmatpush2.msra.mxu0 0.0
    %292 = vmatprep.mubr.f32.mxu0 0.0
    %293 = vmatmul.mubr.f32.gmra.mxu0 %v226
    %v294 = vpop.f32.mrf.mxu0
    %v295 = vadd.f32 0.0, %v294
    %v296 = vpop.f32.mrf.mxu0
    %297 = vdwg.mxu0
    %v298 = vadd.f32 %v222, %v295
    %v299 = vmul.f32 %v298, %v123
    %v300 = vtanh.pop %v299
    %v301 = vmul.f32 %v300, %v123
    %v302 = vadd.f32 %v301, %v124
    %v303 = vmul.f32 %v302, %v215
    %305 = vrot.lane.b32.xlu0 %v302, 64
    %v306 = vpop.permute.xlu0 %305
    %v308 = vmul.f32 %v302, %v306
    %310 = vrot.lane.b32.xlu0 %v308, 32
    %v311 = vpop.permute.xlu0 %310
    %v313 = vadd.f32 %v303, %v311
    %v314 = vtanh.pop %v313
    %316 = vrot.lane.b32.xlu0 %v314, 64
    %v317 = vpop.permute.xlu0 %316
    %v319 = vmul.f32 %v302, %v317
    %v320 = vld [vmem:[#allocation2 + $0x2] sm:$0x1]
    %322 = vrot.lane.b32.xlu0 %v319, 32
    %v323 = vpop.permute.xlu0 %322
    %v324 = vsel %vm126, %v323, 0
    %326 = vmatprep.subr.mxu0 0.0
    %327 = vmatpush1.msra.mxu0 0.0
    %328 = vmatprep.subr.mxu0 0.0
    %329 = vmatpush1.msra.mxu0 0.0
    %330 = vmatprep.subr.mxu0 0.0
    %331 = vmatpush1.msra.mxu0 0.0
    %332 = vmatprep.subr.mxu0 0.0
    %333 = vmatpush1.msra.mxu0 0.0
    %334 = vmatprep.subr.mxu0 0.0
    %335 = vmatpush1.msra.mxu0 0.0
    %336 = vmatprep.subr.mxu0 0.0
    %337 = vmatpush1.msra.mxu0 0.0
    %338 = vmatprep.subr.mxu0 0.0
    %339 = vmatpush1.msra.mxu0 0.0
    %340 = vmatprep.subr.mxu0 0.0
    %341 = vmatpush1.msra.mxu0 0.0
    %342 = vmatprep.subr.mxu0 0.0
    %343 = vmatpush1.msra.mxu0 0.0
    %344 = vmatprep.subr.mxu0 0.0
    %345 = vmatpush1.msra.mxu0 0.0
    %346 = vmatprep.subr.mxu0 0.0
    %347 = vmatpush1.msra.mxu0 0.0
    %348 = vmatprep.subr.mxu0 0.0
    %349 = vmatpush1.msra.mxu0 0.0
    %350 = vmatprep.subr.mxu0 0.0
    %351 = vmatpush1.msra.mxu0 %v117
    %352 = vmatprep.subr.mxu0 0.0
    %353 = vmatpush1.msra.mxu0 %v116
    %354 = vmatprep.subr.mxu0 0.0
    %355 = vmatpush1.msra.mxu0 %v115
    %356 = vmatprep.subr.mxu0 0.0
    %357 = vmatpush1.msra.mxu0 %v114
    %358 = vmatprep.subr.mxu0 0.0
    %359 = vmatpush2.msra.mxu0 0.0
    %360 = vmatprep.subr.mxu0 0.0
    %361 = vmatpush2.msra.mxu0 0.0
    %362 = vmatprep.subr.mxu0 0.0
    %363 = vmatpush2.msra.mxu0 0.0
    %364 = vmatprep.subr.mxu0 0.0
    %365 = vmatpush2.msra.mxu0 0.0
    %366 = vmatprep.subr.mxu0 0.0
    %367 = vmatpush2.msra.mxu0 0.0
    %368 = vmatprep.subr.mxu0 0.0
    %369 = vmatpush2.msra.mxu0 0.0
    %370 = vmatprep.subr.mxu0 0.0
    %371 = vmatpush2.msra.mxu0 0.0
    %372 = vmatprep.subr.mxu0 0.0
    %373 = vmatpush2.msra.mxu0 0.0
    %374 = vmatprep.subr.mxu0 0.0
    %375 = vmatpush2.msra.mxu0 0.0
    %376 = vmatprep.subr.mxu0 0.0
    %377 = vmatpush2.msra.mxu0 0.0
    %378 = vmatprep.subr.mxu0 0.0
    %379 = vmatpush2.msra.mxu0 0.0
    %380 = vmatprep.subr.mxu0 0.0
    %381 = vmatpush2.msra.mxu0 0.0
    %382 = vmatprep.subr.mxu0 0.0
    %383 = vmatpush2.msra.mxu0 0.0
    %384 = vmatprep.subr.mxu0 0.0
    %385 = vmatpush2.msra.mxu0 0.0
    %386 = vmatprep.subr.mxu0 0.0
    %387 = vmatpush2.msra.mxu0 0.0
    %388 = vmatprep.subr.mxu0 0.0
    %389 = vmatpush2.msra.mxu0 0.0
    %390 = vmatprep.mubr.f32.mxu0 0.0
    %391 = vmatmul.mubr.f32.gmra.mxu0 %v324
    %v392 = vpop.f32.mrf.mxu0
    %v393 = vadd.f32 0.0, %v392
    %v394 = vpop.f32.mrf.mxu0
    %395 = vdwg.mxu0
    %v396 = vadd.f32 %v320, %v393
    %v397 = vmul.f32 %v396, %v123
    %v398 = vtanh.pop %v397
    %v399 = vmul.f32 %v398, %v123
    %v400 = vadd.f32 %v399, %v124
    %v401 = vmul.f32 %v400, %v313
    %403 = vrot.lane.b32.xlu0 %v400, 64
    %v404 = vpop.permute.xlu0 %403
    %v406 = vmul.f32 %v400, %v404
    %408 = vrot.lane.b32.xlu0 %v406, 32
    %v409 = vpop.permute.xlu0 %408
    %v411 = vadd.f32 %v401, %v409
    %v412 = vtanh.pop %v411
    %414 = vrot.lane.b32.xlu0 %v412, 64
    %v415 = vpop.permute.xlu0 %414
    %v417 = vmul.f32 %v400, %v415
    %v418 = vld [vmem:[#allocation2 + $0x3] sm:$0x1]
    %420 = vrot.lane.b32.xlu0 %v417, 32
    %v421 = vpop.permute.xlu0 %420
    %v422 = vsel %vm126, %v421, 0
    %424 = vmatprep.subr.mxu0 0.0
    %425 = vmatpush1.msra.mxu0 0.0
    %426 = vmatprep.subr.mxu0 0.0
    %427 = vmatpush1.msra.mxu0 0.0
    %428 = vmatprep.subr.mxu0 0.0
    %429 = vmatpush1.msra.mxu0 0.0
    %430 = vmatprep.subr.mxu0 0.0
    %431 = vmatpush1.msra.mxu0 0.0
    %432 = vmatprep.subr.mxu0 0.0
    %433 = vmatpush1.msra.mxu0 0.0
    %434 = vmatprep.subr.mxu0 0.0
    %435 = vmatpush1.msra.mxu0 0.0
    %436 = vmatprep.subr.mxu0 0.0
    %437 = vmatpush1.msra.mxu0 0.0
    %438 = vmatprep.subr.mxu0 0.0
    %439 = vmatpush1.msra.mxu0 0.0
    %440 = vmatprep.subr.mxu0 0.0
    %441 = vmatpush1.msra.mxu0 0.0
    %442 = vmatprep.subr.mxu0 0.0
    %443 = vmatpush1.msra.mxu0 0.0
    %444 = vmatprep.subr.mxu0 0.0
    %445 = vmatpush1.msra.mxu0 0.0
    %446 = vmatprep.subr.mxu0 0.0
    %447 = vmatpush1.msra.mxu0 0.0
    %448 = vmatprep.subr.mxu0 0.0
    %449 = vmatpush1.msra.mxu0 %v117
    %450 = vmatprep.subr.mxu0 0.0
    %451 = vmatpush1.msra.mxu0 %v116
    %452 = vmatprep.subr.mxu0 0.0
    %453 = vmatpush1.msra.mxu0 %v115
    %454 = vmatprep.subr.mxu0 0.0
    %455 = vmatpush1.msra.mxu0 %v114
    %456 = vmatprep.subr.mxu0 0.0
    %457 = vmatpush2.msra.mxu0 0.0
    %458 = vmatprep.subr.mxu0 0.0
    %459 = vmatpush2.msra.mxu0 0.0
    %460 = vmatprep.subr.mxu0 0.0
    %461 = vmatpush2.msra.mxu0 0.0
    %462 = vmatprep.subr.mxu0 0.0
    %463 = vmatpush2.msra.mxu0 0.0
    %464 = vmatprep.subr.mxu0 0.0
    %465 = vmatpush2.msra.mxu0 0.0
    %466 = vmatprep.subr.mxu0 0.0
    %467 = vmatpush2.msra.mxu0 0.0
    %468 = vmatprep.subr.mxu0 0.0
    %469 = vmatpush2.msra.mxu0 0.0
    %470 = vmatprep.subr.mxu0 0.0
    %471 = vmatpush2.msra.mxu0 0.0
    %472 = vmatprep.subr.mxu0 0.0
    %473 = vmatpush2.msra.mxu0 0.0
    %474 = vmatprep.subr.mxu0 0.0
    %475 = vmatpush2.msra.mxu0 0.0
    %476 = vmatprep.subr.mxu0 0.0
    %477 = vmatpush2.msra.mxu0 0.0
    %478 = vmatprep.subr.mxu0 0.0
    %479 = vmatpush2.msra.mxu0 0.0
    %480 = vmatprep.subr.mxu0 0.0
    %481 = vmatpush2.msra.mxu0 0.0
    %482 = vmatprep.subr.mxu0 0.0
    %483 = vmatpush2.msra.mxu0 0.0
    %484 = vmatprep.subr.mxu0 0.0
    %485 = vmatpush2.msra.mxu0 0.0
    %486 = vmatprep.subr.mxu0 0.0
    %487 = vmatpush2.msra.mxu0 0.0
    %488 = vmatprep.mubr.f32.mxu0 0.0
    %489 = vmatmul.mubr.f32.gmra.mxu0 %v422
    %v490 = vpop.f32.mrf.mxu0
    %v491 = vadd.f32 0.0, %v490
    %v492 = vpop.f32.mrf.mxu0
    %493 = vdwg.mxu0
    %v494 = vadd.f32 %v418, %v491
    %v495 = vmul.f32 %v494, %v123
    %v496 = vtanh.pop %v495
    %v497 = vmul.f32 %v496, %v123
    %v498 = vadd.f32 %v497, %v124
    %v499 = vmul.f32 %v498, %v411
    %501 = vrot.lane.b32.xlu0 %v498, 64
    %v502 = vpop.permute.xlu0 %501
    %v504 = vmul.f32 %v498, %v502
    %506 = vrot.lane.b32.xlu0 %v504, 32
    %v507 = vpop.permute.xlu0 %506
    %v509 = vadd.f32 %v499, %v507
    %v510 = vtanh.pop %v509
    %512 = vrot.lane.b32.xlu0 %v510, 64
    %v513 = vpop.permute.xlu0 %512
    %v515 = vmul.f32 %v498, %v513
    %v516 = vld [vmem:[#allocation2 + $0x4] sm:$0x1]
    %518 = vrot.lane.b32.xlu0 %v515, 32
    %v519 = vpop.permute.xlu0 %518
    %v520 = vsel %vm126, %v519, 0
    %522 = vmatprep.subr.mxu0 0.0
    %523 = vmatpush1.msra.mxu0 0.0
    %524 = vmatprep.subr.mxu0 0.0
    %525 = vmatpush1.msra.mxu0 0.0
    %526 = vmatprep.subr.mxu0 0.0
    %527 = vmatpush1.msra.mxu0 0.0
    %528 = vmatprep.subr.mxu0 0.0
    %529 = vmatpush1.msra.mxu0 0.0
    %530 = vmatprep.subr.mxu0 0.0
    %531 = vmatpush1.msra.mxu0 0.0
    %532 = vmatprep.subr.mxu0 0.0
    %533 = vmatpush1.msra.mxu0 0.0
    %534 = vmatprep.subr.mxu0 0.0
    %535 = vmatpush1.msra.mxu0 0.0
    %536 = vmatprep.subr.mxu0 0.0
    %537 = vmatpush1.msra.mxu0 0.0
    %538 = vmatprep.subr.mxu0 0.0
    %539 = vmatpush1.msra.mxu0 0.0
    %540 = vmatprep.subr.mxu0 0.0
    %541 = vmatpush1.msra.mxu0 0.0
    %542 = vmatprep.subr.mxu0 0.0
    %543 = vmatpush1.msra.mxu0 0.0
    %544 = vmatprep.subr.mxu0 0.0
    %545 = vmatpush1.msra.mxu0 0.0
    %546 = vmatprep.subr.mxu0 0.0
    %547 = vmatpush1.msra.mxu0 %v117
    %548 = vmatprep.subr.mxu0 0.0
    %549 = vmatpush1.msra.mxu0 %v116
    %550 = vmatprep.subr.mxu0 0.0
    %551 = vmatpush1.msra.mxu0 %v115
    %552 = vmatprep.subr.mxu0 0.0
    %553 = vmatpush1.msra.mxu0 %v114
    %554 = vmatprep.subr.mxu0 0.0
    %555 = vmatpush2.msra.mxu0 0.0
    %556 = vmatprep.subr.mxu0 0.0
    %557 = vmatpush2.msra.mxu0 0.0
    %558 = vmatprep.subr.mxu0 0.0
    %559 = vmatpush2.msra.mxu0 0.0
    %560 = vmatprep.subr.mxu0 0.0
    %561 = vmatpush2.msra.mxu0 0.0
    %562 = vmatprep.subr.mxu0 0.0
    %563 = vmatpush2.msra.mxu0 0.0
    %564 = vmatprep.subr.mxu0 0.0
    %565 = vmatpush2.msra.mxu0 0.0
    %566 = vmatprep.subr.mxu0 0.0
    %567 = vmatpush2.msra.mxu0 0.0
    %568 = vmatprep.subr.mxu0 0.0
    %569 = vmatpush2.msra.mxu0 0.0
    %570 = vmatprep.subr.mxu0 0.0
    %571 = vmatpush2.msra.mxu0 0.0
    %572 = vmatprep.subr.mxu0 0.0
    %573 = vmatpush2.msra.mxu0 0.0
    %574 = vmatprep.subr.mxu0 0.0
    %575 = vmatpush2.msra.mxu0 0.0
    %576 = vmatprep.subr.mxu0 0.0
    %577 = vmatpush2.msra.mxu0 0.0
    %578 = vmatprep.subr.mxu0 0.0
    %579 = vmatpush2.msra.mxu0 0.0
    %580 = vmatprep.subr.mxu0 0.0
    %581 = vmatpush2.msra.mxu0 0.0
    %582 = vmatprep.subr.mxu0 0.0
    %583 = vmatpush2.msra.mxu0 0.0
    %584 = vmatprep.subr.mxu0 0.0
    %585 = vmatpush2.msra.mxu0 0.0
    %586 = vmatprep.mubr.f32.mxu0 0.0
    %587 = vmatmul.mubr.f32.gmra.mxu0 %v520
    %v588 = vpop.f32.mrf.mxu0
    %v589 = vadd.f32 0.0, %v588
    %v590 = vpop.f32.mrf.mxu0
    %591 = vdwg.mxu0
    %v592 = vadd.f32 %v516, %v589
    %v593 = vmul.f32 %v592, %v123
    %v594 = vtanh.pop %v593
    %v595 = vmul.f32 %v594, %v123
    %v596 = vadd.f32 %v595, %v124
    %v597 = vmul.f32 %v596, %v509
    %599 = vrot.lane.b32.xlu0 %v596, 64
    %v600 = vpop.permute.xlu0 %599
    %v602 = vmul.f32 %v596, %v600
    %604 = vrot.lane.b32.xlu0 %v602, 32
    %v605 = vpop.permute.xlu0 %604
    %v607 = vadd.f32 %v597, %v605
    %v608 = vtanh.pop %v607
    %610 = vrot.lane.b32.xlu0 %v608, 64
    %v611 = vpop.permute.xlu0 %610
    %v613 = vmul.f32 %v596, %v611
    %v614 = vld [vmem:[#allocation2 + $0x5] sm:$0x1]
    %616 = vrot.lane.b32.xlu0 %v613, 32
    %v617 = vpop.permute.xlu0 %616
    %v618 = vsel %vm126, %v617, 0
    %620 = vmatprep.subr.mxu0 0.0
    %621 = vmatpush1.msra.mxu0 0.0
    %622 = vmatprep.subr.mxu0 0.0
    %623 = vmatpush1.msra.mxu0 0.0
    %624 = vmatprep.subr.mxu0 0.0
    %625 = vmatpush1.msra.mxu0 0.0
    %626 = vmatprep.subr.mxu0 0.0
    %627 = vmatpush1.msra.mxu0 0.0
    %628 = vmatprep.subr.mxu0 0.0
    %629 = vmatpush1.msra.mxu0 0.0
    %630 = vmatprep.subr.mxu0 0.0
    %631 = vmatpush1.msra.mxu0 0.0
    %632 = vmatprep.subr.mxu0 0.0
    %633 = vmatpush1.msra.mxu0 0.0
    %634 = vmatprep.subr.mxu0 0.0
    %635 = vmatpush1.msra.mxu0 0.0
    %636 = vmatprep.subr.mxu0 0.0
    %637 = vmatpush1.msra.mxu0 0.0
    %638 = vmatprep.subr.mxu0 0.0
    %639 = vmatpush1.msra.mxu0 0.0
    %640 = vmatprep.subr.mxu0 0.0
    %641 = vmatpush1.msra.mxu0 0.0
    %642 = vmatprep.subr.mxu0 0.0
    %643 = vmatpush1.msra.mxu0 0.0
    %644 = vmatprep.subr.mxu0 0.0
    %645 = vmatpush1.msra.mxu0 %v117
    %646 = vmatprep.subr.mxu0 0.0
    %647 = vmatpush1.msra.mxu0 %v116
    %648 = vmatprep.subr.mxu0 0.0
    %649 = vmatpush1.msra.mxu0 %v115
    %650 = vmatprep.subr.mxu0 0.0
    %651 = vmatpush1.msra.mxu0 %v114
    %652 = vmatprep.subr.mxu0 0.0
    %653 = vmatpush2.msra.mxu0 0.0
    %654 = vmatprep.subr.mxu0 0.0
    %655 = vmatpush2.msra.mxu0 0.0
    %656 = vmatprep.subr.mxu0 0.0
    %657 = vmatpush2.msra.mxu0 0.0
    %658 = vmatprep.subr.mxu0 0.0
    %659 = vmatpush2.msra.mxu0 0.0
    %660 = vmatprep.subr.mxu0 0.0
    %661 = vmatpush2.msra.mxu0 0.0
    %662 = vmatprep.subr.mxu0 0.0
    %663 = vmatpush2.msra.mxu0 0.0
    %664 = vmatprep.subr.mxu0 0.0
    %665 = vmatpush2.msra.mxu0 0.0
    %666 = vmatprep.subr.mxu0 0.0
    %667 = vmatpush2.msra.mxu0 0.0
    %668 = vmatprep.subr.mxu0 0.0
    %669 = vmatpush2.msra.mxu0 0.0
    %670 = vmatprep.subr.mxu0 0.0
    %671 = vmatpush2.msra.mxu0 0.0
    %672 = vmatprep.subr.mxu0 0.0
    %673 = vmatpush2.msra.mxu0 0.0
    %674 = vmatprep.subr.mxu0 0.0
    %675 = vmatpush2.msra.mxu0 0.0
    %676 = vmatprep.subr.mxu0 0.0
    %677 = vmatpush2.msra.mxu0 0.0
    %678 = vmatprep.subr.mxu0 0.0
    %679 = vmatpush2.msra.mxu0 0.0
    %680 = vmatprep.subr.mxu0 0.0
    %681 = vmatpush2.msra.mxu0 0.0
    %682 = vmatprep.subr.mxu0 0.0
    %683 = vmatpush2.msra.mxu0 0.0
    %684 = vmatprep.mubr.f32.mxu0 0.0
    %685 = vmatmul.mubr.f32.gmra.mxu0 %v618
    %v686 = vpop.f32.mrf.mxu0
    %v687 = vadd.f32 0.0, %v686
    %v688 = vpop.f32.mrf.mxu0
    %689 = vdwg.mxu0
    %v690 = vadd.f32 %v614, %v687
    %v691 = vmul.f32 %v690, %v123
    %v692 = vtanh.pop %v691
    %v693 = vmul.f32 %v692, %v123
    %v694 = vadd.f32 %v693, %v124
    %v695 = vmul.f32 %v694, %v607
    %697 = vrot.lane.b32.xlu0 %v694, 64
    %v698 = vpop.permute.xlu0 %697
    %v700 = vmul.f32 %v694, %v698
    %702 = vrot.lane.b32.xlu0 %v700, 32
    %v703 = vpop.permute.xlu0 %702
    %v705 = vadd.f32 %v695, %v703
    %v706 = vtanh.pop %v705
    %708 = vrot.lane.b32.xlu0 %v706, 64
    %v709 = vpop.permute.xlu0 %708
    %v711 = vmul.f32 %v694, %v709
    %v712 = vld [vmem:[#allocation2 + $0x6] sm:$0x1]
    %714 = vrot.lane.b32.xlu0 %v711, 32
    %v715 = vpop.permute.xlu0 %714
    %v716 = vsel %vm126, %v715, 0
    %718 = vmatprep.subr.mxu0 0.0
    %719 = vmatpush1.msra.mxu0 0.0
    %720 = vmatprep.subr.mxu0 0.0
    %721 = vmatpush1.msra.mxu0 0.0
    %722 = vmatprep.subr.mxu0 0.0
    %723 = vmatpush1.msra.mxu0 0.0
    %724 = vmatprep.subr.mxu0 0.0
    %725 = vmatpush1.msra.mxu0 0.0
    %726 = vmatprep.subr.mxu0 0.0
    %727 = vmatpush1.msra.mxu0 0.0
    %728 = vmatprep.subr.mxu0 0.0
    %729 = vmatpush1.msra.mxu0 0.0
    %730 = vmatprep.subr.mxu0 0.0
    %731 = vmatpush1.msra.mxu0 0.0
    %732 = vmatprep.subr.mxu0 0.0
    %733 = vmatpush1.msra.mxu0 0.0
    %734 = vmatprep.subr.mxu0 0.0
    %735 = vmatpush1.msra.mxu0 0.0
    %736 = vmatprep.subr.mxu0 0.0
    %737 = vmatpush1.msra.mxu0 0.0
    %738 = vmatprep.subr.mxu0 0.0
    %739 = vmatpush1.msra.mxu0 0.0
    %740 = vmatprep.subr.mxu0 0.0
    %741 = vmatpush1.msra.mxu0 0.0
    %742 = vmatprep.subr.mxu0 0.0
    %743 = vmatpush1.msra.mxu0 %v117
    %744 = vmatprep.subr.mxu0 0.0
    %745 = vmatpush1.msra.mxu0 %v116
    %746 = vmatprep.subr.mxu0 0.0
    %747 = vmatpush1.msra.mxu0 %v115
    %748 = vmatprep.subr.mxu0 0.0
    %749 = vmatpush1.msra.mxu0 %v114
    %750 = vmatprep.subr.mxu0 0.0
    %751 = vmatpush2.msra.mxu0 0.0
    %752 = vmatprep.subr.mxu0 0.0
    %753 = vmatpush2.msra.mxu0 0.0
    %754 = vmatprep.subr.mxu0 0.0
    %755 = vmatpush2.msra.mxu0 0.0
    %756 = vmatprep.subr.mxu0 0.0
    %757 = vmatpush2.msra.mxu0 0.0
    %758 = vmatprep.subr.mxu0 0.0
    %759 = vmatpush2.msra.mxu0 0.0
    %760 = vmatprep.subr.mxu0 0.0
    %761 = vmatpush2.msra.mxu0 0.0
    %762 = vmatprep.subr.mxu0 0.0
    %763 = vmatpush2.msra.mxu0 0.0
    %764 = vmatprep.subr.mxu0 0.0
    %765 = vmatpush2.msra.mxu0 0.0
    %766 = vmatprep.subr.mxu0 0.0
    %767 = vmatpush2.msra.mxu0 0.0
    %768 = vmatprep.subr.mxu0 0.0
    %769 = vmatpush2.msra.mxu0 0.0
    %770 = vmatprep.subr.mxu0 0.0
    %771 = vmatpush2.msra.mxu0 0.0
    %772 = vmatprep.subr.mxu0 0.0
    %773 = vmatpush2.msra.mxu0 0.0
    %774 = vmatprep.subr.mxu0 0.0
    %775 = vmatpush2.msra.mxu0 0.0
    %776 = vmatprep.subr.mxu0 0.0
    %777 = vmatpush2.msra.mxu0 0.0
    %778 = vmatprep.subr.mxu0 0.0
    %779 = vmatpush2.msra.mxu0 0.0
    %780 = vmatprep.subr.mxu0 0.0
    %781 = vmatpush2.msra.mxu0 0.0
    %782 = vmatprep.mubr.f32.mxu0 0.0
    %783 = vmatmul.mubr.f32.gmra.mxu0 %v716
    %v784 = vpop.f32.mrf.mxu0
    %v785 = vadd.f32 0.0, %v784
    %v786 = vpop.f32.mrf.mxu0
    %787 = vdwg.mxu0
    %v788 = vadd.f32 %v712, %v785
    %v789 = vmul.f32 %v788, %v123
    %v790 = vtanh.pop %v789
    %v791 = vmul.f32 %v790, %v123
    %v792 = vadd.f32 %v791, %v124
    %v793 = vmul.f32 %v792, %v705
    %795 = vrot.lane.b32.xlu0 %v792, 64
    %v796 = vpop.permute.xlu0 %795
    %v798 = vmul.f32 %v792, %v796
    %800 = vrot.lane.b32.xlu0 %v798, 32
    %v801 = vpop.permute.xlu0 %800
    %v803 = vadd.f32 %v793, %v801
    %v804 = vtanh.pop %v803
    %806 = vrot.lane.b32.xlu0 %v804, 64
    %v807 = vpop.permute.xlu0 %806
    %v809 = vmul.f32 %v792, %v807
    %v810 = vld [vmem:[#allocation2 + $0x7] sm:$0x1]
    %812 = vrot.lane.b32.xlu0 %v809, 32
    %v813 = vpop.permute.xlu0 %812
    %v814 = vsel %vm126, %v813, 0
    %816 = vmatprep.subr.mxu0 0.0
    %817 = vmatpush1.msra.mxu0 0.0
    %818 = vmatprep.subr.mxu0 0.0
    %819 = vmatpush1.msra.mxu0 0.0
    %820 = vmatprep.subr.mxu0 0.0
    %821 = vmatpush1.msra.mxu0 0.0
    %822 = vmatprep.subr.mxu0 0.0
    %823 = vmatpush1.msra.mxu0 0.0
    %824 = vmatprep.subr.mxu0 0.0
    %825 = vmatpush1.msra.mxu0 0.0
    %826 = vmatprep.subr.mxu0 0.0
    %827 = vmatpush1.msra.mxu0 0.0
    %828 = vmatprep.subr.mxu0 0.0
    %829 = vmatpush1.msra.mxu0 0.0
    %830 = vmatprep.subr.mxu0 0.0
    %831 = vmatpush1.msra.mxu0 0.0
    %832 = vmatprep.subr.mxu0 0.0
    %833 = vmatpush1.msra.mxu0 0.0
    %834 = vmatprep.subr.mxu0 0.0
    %835 = vmatpush1.msra.mxu0 0.0
    %836 = vmatprep.subr.mxu0 0.0
    %837 = vmatpush1.msra.mxu0 0.0
    %838 = vmatprep.subr.mxu0 0.0
    %839 = vmatpush1.msra.mxu0 0.0
    %840 = vmatprep.subr.mxu0 0.0
    %841 = vmatpush1.msra.mxu0 %v117
    %842 = vmatprep.subr.mxu0 0.0
    %843 = vmatpush1.msra.mxu0 %v116
    %844 = vmatprep.subr.mxu0 0.0
    %845 = vmatpush1.msra.mxu0 %v115
    %846 = vmatprep.subr.mxu0 0.0
    %847 = vmatpush1.msra.mxu0 %v114
    %848 = vmatprep.subr.mxu0 0.0
    %849 = vmatpush2.msra.mxu0 0.0
    %850 = vmatprep.subr.mxu0 0.0
    %851 = vmatpush2.msra.mxu0 0.0
    %852 = vmatprep.subr.mxu0 0.0
    %853 = vmatpush2.msra.mxu0 0.0
    %854 = vmatprep.subr.mxu0 0.0
    %855 = vmatpush2.msra.mxu0 0.0
    %856 = vmatprep.subr.mxu0 0.0
    %857 = vmatpush2.msra.mxu0 0.0
    %858 = vmatprep.subr.mxu0 0.0
    %859 = vmatpush2.msra.mxu0 0.0
    %860 = vmatprep.subr.mxu0 0.0
    %861 = vmatpush2.msra.mxu0 0.0
    %862 = vmatprep.subr.mxu0 0.0
    %863 = vmatpush2.msra.mxu0 0.0
    %864 = vmatprep.subr.mxu0 0.0
    %865 = vmatpush2.msra.mxu0 0.0
    %866 = vmatprep.subr.mxu0 0.0
    %867 = vmatpush2.msra.mxu0 0.0
    %868 = vmatprep.subr.mxu0 0.0
    %869 = vmatpush2.msra.mxu0 0.0
    %870 = vmatprep.subr.mxu0 0.0
    %871 = vmatpush2.msra.mxu0 0.0
    %872 = vmatprep.subr.mxu0 0.0
    %873 = vmatpush2.msra.mxu0 0.0
    %874 = vmatprep.subr.mxu0 0.0
    %875 = vmatpush2.msra.mxu0 0.0
    %876 = vmatprep.subr.mxu0 0.0
    %877 = vmatpush2.msra.mxu0 0.0
    %878 = vmatprep.subr.mxu0 0.0
    %879 = vmatpush2.msra.mxu0 0.0
    %880 = vmatprep.mubr.f32.mxu0 0.0
    %881 = vmatmul.mubr.f32.gmra.mxu0 %v814
    %v882 = vpop.f32.mrf.mxu0
    %v883 = vadd.f32 0.0, %v882
    %v884 = vpop.f32.mrf.mxu0
    %885 = vdwg.mxu0
    %v886 = vadd.f32 %v810, %v883
    %v887 = vmul.f32 %v886, %v123
    %v888 = vtanh.pop %v887
    %v889 = vmul.f32 %v888, %v123
    %v890 = vadd.f32 %v889, %v124
    %v891 = vmul.f32 %v890, %v803
    %893 = vrot.lane.b32.xlu0 %v890, 64
    %v894 = vpop.permute.xlu0 %893
    %v896 = vmul.f32 %v890, %v894
    %898 = vrot.lane.b32.xlu0 %v896, 32
    %v899 = vpop.permute.xlu0 %898
    %v901 = vadd.f32 %v891, %v899
    %v902 = vtanh.pop %v901
    %904 = vrot.lane.b32.xlu0 %v902, 64
    %v905 = vpop.permute.xlu0 %904
    %v907 = vmul.f32 %v890, %v905
    %v908 = vld [vmem:[%s4] sm:$0xff]
    %v909 = vld [vmem:[%s4 + $0x8] sm:$0xff]
    %v910 = vld [vmem:[%s4 + $0x10] sm:$0xff]
    %v911 = vld [vmem:[%s4 + $0x18] sm:$0xff]
    %v912 = vld [vmem:[#allocation3] sm:$0x1]
    %914 = vrot.lane.b32.xlu0 %v907, 32
    %v915 = vpop.permute.xlu0 %914
    %v916 = vsel %vm126, %v915, 0
    %918 = vmatprep.subr.mxu0 0.0
    %919 = vmatpush1.msra.mxu0 0.0
    %920 = vmatprep.subr.mxu0 0.0
    %921 = vmatpush1.msra.mxu0 0.0
    %922 = vmatprep.subr.mxu0 0.0
    %923 = vmatpush1.msra.mxu0 0.0
    %924 = vmatprep.subr.mxu0 0.0
    %925 = vmatpush1.msra.mxu0 0.0
    %926 = vmatprep.subr.mxu0 0.0
    %927 = vmatpush1.msra.mxu0 0.0
    %928 = vmatprep.subr.mxu0 0.0
    %929 = vmatpush1.msra.mxu0 0.0
    %930 = vmatprep.subr.mxu0 0.0
    %931 = vmatpush1.msra.mxu0 0.0
    %932 = vmatprep.subr.mxu0 0.0
    %933 = vmatpush1.msra.mxu0 0.0
    %934 = vmatprep.subr.mxu0 0.0
    %935 = vmatpush1.msra.mxu0 0.0
    %936 = vmatprep.subr.mxu0 0.0
    %937 = vmatpush1.msra.mxu0 0.0
    %938 = vmatprep.subr.mxu0 0.0
    %939 = vmatpush1.msra.mxu0 0.0
    %940 = vmatprep.subr.mxu0 0.0
    %941 = vmatpush1.msra.mxu0 0.0
    %942 = vmatprep.subr.mxu0 0.0
    %943 = vmatpush1.msra.mxu0 %v911
    %944 = vmatprep.subr.mxu0 0.0
    %945 = vmatpush1.msra.mxu0 %v910
    %946 = vmatprep.subr.mxu0 0.0
    %947 = vmatpush1.msra.mxu0 %v909
    %948 = vmatprep.subr.mxu0 0.0
    %949 = vmatpush1.msra.mxu0 %v908
    %950 = vmatprep.subr.mxu0 0.0
    %951 = vmatpush2.msra.mxu0 0.0
    %952 = vmatprep.subr.mxu0 0.0
    %953 = vmatpush2.msra.mxu0 0.0
    %954 = vmatprep.subr.mxu0 0.0
    %955 = vmatpush2.msra.mxu0 0.0
    %956 = vmatprep.subr.mxu0 0.0
    %957 = vmatpush2.msra.mxu0 0.0
    %958 = vmatprep.subr.mxu0 0.0
    %959 = vmatpush2.msra.mxu0 0.0
    %960 = vmatprep.subr.mxu0 0.0
    %961 = vmatpush2.msra.mxu0 0.0
    %962 = vmatprep.subr.mxu0 0.0
    %963 = vmatpush2.msra.mxu0 0.0
    %964 = vmatprep.subr.mxu0 0.0
    %965 = vmatpush2.msra.mxu0 0.0
    %966 = vmatprep.subr.mxu0 0.0
    %967 = vmatpush2.msra.mxu0 0.0
    %968 = vmatprep.subr.mxu0 0.0
    %969 = vmatpush2.msra.mxu0 0.0
    %970 = vmatprep.subr.mxu0 0.0
    %971 = vmatpush2.msra.mxu0 0.0
    %972 = vmatprep.subr.mxu0 0.0
    %973 = vmatpush2.msra.mxu0 0.0
    %974 = vmatprep.subr.mxu0 0.0
    %975 = vmatpush2.msra.mxu0 0.0
    %976 = vmatprep.subr.mxu0 0.0
    %977 = vmatpush2.msra.mxu0 0.0
    %978 = vmatprep.subr.mxu0 0.0
    %979 = vmatpush2.msra.mxu0 0.0
    %980 = vmatprep.subr.mxu0 0.0
    %981 = vmatpush2.msra.mxu0 0.0
    %982 = vmatprep.mubr.f32.mxu0 0.0
    %983 = vmatmul.mubr.f32.gmra.mxu0 %v916
    %v984 = vpop.f32.mrf.mxu0
    %v985 = vadd.f32 %v912, %v984
    %v986 = vpop.f32.mrf.mxu0
    %987 = vdwg.mxu0
    %vm988 = vcmask 0
    %989 = vst.msk [vmem:[#allocation4] sm:$0x1] %vm988, %v985
    // Predicated region
    $region26: #{tpu_custom_call.1} parent=1 // pred_check
      _
    $region27: #{tpu_custom_call.1} parent=1 // pred_check_branch
      %991 = sbr.rel (0) target = $region29
    $region28: #{tpu_custom_call.1} parent=1 // pred_region
      %s993 = ssub.s32 16, 16
      %994 = vsyncadd [#allocation5], %s993
      %s996 = sshll.u32 [#allocation4], 4
      %s997 = int_to_ptr.vmem [resolvable:$true] %s996
      %999 = dma.vmem_to_hbm [thread:$0]  %s997, 16, %s6, [#allocation5]
    $region29: #{tpu_custom_call.1} parent=1 // pred_fallthru
      _
    // Predicated region
    $region30: #{tpu_custom_call.1} parent=1 // pred_check
      _
    $region31: #{tpu_custom_call.1} parent=1 // pred_check_branch
      %1001 = sbr.rel (0) target = $region33
    $region32: #{tpu_custom_call.1} parent=1 // pred_region
      %1002 = dma.done [#allocation5], 16
    $region33: #{tpu_custom_call.1} parent=1 // pred_fallthru
      _
    %1003 = vsyncpa [#allocation5], 1

</llo_original>
